<compile_context>
chip_gen: v7x
topology: tpu7x:2x2x1
jax: 0.10.0
libtpu: 0.0.40
codegen_flags: <defaults>
</compile_context>

<pallas_src>
import jax
import jax.numpy as jnp
from jax import lax
from jax.experimental import pallas as pl
from jax.experimental.pallas import tpu as pltpu


def _yolo_kernel(x_ref, scale_ref, offset_ref, o_ref):
    """Transforms one (no, ny*nx) slab belonging to one (batch, anchor) pair."""
    x = x_ref[...].astype(jnp.float32)            # (no, S)
    scale = scale_ref[...].astype(jnp.float32)    # (no, 1)  -> lane-broadcast
    offset = offset_ref[...]                      # (no, S)  f32

    # Channel index along the sublane axis selects the transform.
    c = lax.broadcasted_iota(jnp.int32, x.shape, 0)
    is_exp = jnp.logical_and(c >= 2, c <= 3)      # w/h channels use exp()

    # One transcendental per element:
    #   w/h channels : e = exp(x)
    #   sigmoid chans: e = exp(-|x|); sigmoid = where(x>=0, 1, e) / (1 + e)
    t = jnp.where(is_exp, x, -jnp.abs(x))
    e = jnp.exp(t)
    sig = jnp.where(x >= 0.0, 1.0, e) / (1.0 + e)
    val = jnp.where(is_exp, e, sig)

    o_ref[...] = (val * scale + offset).astype(o_ref.dtype)


def yolo_layer_forward(x, anchors, num_classes, img_size, training=False):
    """JAX/Pallas equivalent of YOLOLayer.forward.

    x:       (bs, na*no, ny, nx) float32
    anchors: (na, 2) float32
    Returns (bs, na*ny*nx, no) in eval mode, (bs, na, ny, nx, no) in training.
    """
    na = anchors.shape[0]
    no = num_classes + 5
    bs, ch, ny, nx = x.shape
    assert ch == na * no, (ch, na, no)
    stride = img_size // ny
    S = ny * nx

    if training:
        # Training mode: pure reshape/permute, no elementwise transform.
        return jnp.transpose(x.reshape(bs, na, no, ny, nx), (0, 1, 3, 4, 2))

    # ---- host-side precomputed tables (tiny, hoisted out of the hot path) ----
    stride_f = jnp.float32(stride)
    sidx = jnp.arange(S, dtype=jnp.int32)
    xv = (sidx % nx).astype(jnp.float32) * stride_f      # column index * stride
    yv = (sidx // nx).astype(jnp.float32) * stride_f     # row index * stride
    offset = jnp.zeros((no, S), jnp.float32).at[0].set(xv).at[1].set(yv)

    anchors_f = anchors.astype(jnp.float32)
    scale = jnp.ones((na, no), jnp.float32)
    scale = scale.at[:, 0].set(stride_f).at[:, 1].set(stride_f)
    scale = scale.at[:, 2].set(anchors_f[:, 0]).at[:, 3].set(anchors_f[:, 1])
    scale = scale.reshape(na, no, 1)

    # Channel axis fused into the block; spatial flattened lane-dense.
    x3 = x.reshape(bs * na, no, S)

    total = bs * na * no * S
    cost = pl.CostEstimate(
        flops=6 * total,
        transcendentals=total,
        bytes_accessed=2 * 4 * total + 4 * no * S + 4 * na * no,
    )

    out = pl.pallas_call(
        _yolo_kernel,
        out_shape=jax.ShapeDtypeStruct((bs * na, no, S), x.dtype),
        grid=(bs * na,),
        in_specs=[
            pl.BlockSpec((None, no, S), lambda i: (i, 0, 0)),       # activations
            pl.BlockSpec((None, no, 1), lambda i: (i % na, 0, 0)),  # per-anchor scales
            pl.BlockSpec((no, S), lambda i: (0, 0)),                # grid offsets (shared)
        ],
        out_specs=pl.BlockSpec((None, no, S), lambda i: (i, 0, 0)),
        compiler_params=pltpu.CompilerParams(
            dimension_semantics=("parallel",)),
        cost_estimate=cost,
    )(x3, scale, offset)

    # (bs*na, no, S) -> (bs, na, S, no) -> (bs, na*ny*nx, no)  (layout glue)
    out = out.reshape(bs, na, no, S)
    out = jnp.transpose(out, (0, 1, 3, 2)).reshape(bs, na * S, no)
    return out


def yolo_layer_reference(x, anchors, num_classes, img_size):
    """Pure-JAX reference mirroring the PyTorch eval-mode forward."""
    na = anchors.shape[0]
    no = num_classes + 5
    bs, _, ny, nx = x.shape
    stride = img_size // ny
    xp = jnp.transpose(x.reshape(bs, na, no, ny, nx), (0, 1, 3, 4, 2))
    yv, xv = jnp.meshgrid(jnp.arange(ny), jnp.arange(nx), indexing="ij")
    grid = jnp.stack((xv, yv), axis=2).reshape(1, 1, ny, nx, 2).astype(x.dtype)
    anchor_grid = anchors.reshape(1, na, 1, 1, 2).astype(x.dtype)
    xy = (jax.nn.sigmoid(xp[..., 0:2]) + grid) * stride
    wh = jnp.exp(xp[..., 2:4]) * anchor_grid
    rest = jax.nn.sigmoid(xp[..., 4:])
    out = jnp.concatenate([xy, wh, rest], axis=-1)
    return out.reshape(bs, -1, no)


if __name__ == "__main__":
    # Deterministic small config: 3 anchors, 2 classes -> no = 7 channels/anchor.
    anchor_list = [(10, 13), (16, 30), (33, 23)]
    num_classes = 2
    na = len(anchor_list)
    no = num_classes + 5

    bs, ny, nx = 2, 16, 16
    img_size = 128  # stride = 128 // 16 = 8

    key = jax.random.PRNGKey(0)
    x = jax.random.normal(key, (bs, na * no, ny, nx), dtype=jnp.float32)
    anchors = jnp.asarray(anchor_list, dtype=jnp.float32)  # (na, 2)

    out = yolo_layer_forward(x, anchors, num_classes, img_size, training=False)
    out = jax.block_until_ready(out)

    ref = yolo_layer_reference(x, anchors, num_classes, img_size)
    assert out.shape == (bs, na * ny * nx, no), out.shape
    assert jnp.allclose(out, ref, atol=1e-5, rtol=1e-5), "mismatch vs reference"

    # TODO(synk): training-time MSE/BCE losses of the original module are not
    # part of forward() and are not implemented here.
    print("KERNEL_OK")
</pallas_src>

<mosaic_0001>
module attributes {stable_mosaic.version = 11 : i64} {
  func.func @_yolo_kernel(%arg0: i32, %arg1: memref<1x7x256xf32, #tpu.memory_space<vmem>>, %arg2: memref<1x7x1xf32, #tpu.memory_space<vmem>>, %arg3: memref<7x256xf32, #tpu.memory_space<vmem>>, %arg4: memref<1x7x256xf32, #tpu.memory_space<vmem>>) attributes {dimension_semantics = [#tpu.dimension_semantics<parallel>], iteration_bounds = array<i64: 6>, scalar_prefetch = 0 : i64, scratch_operands = 0 : i64, tpu.core_type = #tpu.core_type<tc>, window_params = [{transform_indices = @transform_0, window_bounds = array<i64: 1, 7, 256>}, {transform_indices = @transform_1, window_bounds = array<i64: 1, 7, 1>}, {pipeline_mode = #tpu.pipeline_mode<synchronous>, transform_indices = @transform_2, window_bounds = array<i64: 7, 256>}, {transform_indices = @transform_3, window_bounds = array<i64: 1, 7, 256>}]} {
    %c0 = arith.constant 0 : index
    %c0_0 = arith.constant 0 : index
    %c0_1 = arith.constant 0 : index
    %0 = vector.load %arg1[%c0, %c0_0, %c0_1] : memref<1x7x256xf32, #tpu.memory_space<vmem>>, vector<1x7x256xf32>
    %1 = vector.shape_cast %0 : vector<1x7x256xf32> to vector<7x256xf32>
    %c0_2 = arith.constant 0 : index
    %c0_3 = arith.constant 0 : index
    %c0_4 = arith.constant 0 : index
    %2 = vector.load %arg2[%c0_2, %c0_3, %c0_4] : memref<1x7x1xf32, #tpu.memory_space<vmem>>, vector<1x7x1xf32>
    %3 = vector.shape_cast %2 : vector<1x7x1xf32> to vector<7x1xf32>
    %c0_5 = arith.constant 0 : index
    %c0_6 = arith.constant 0 : index
    %4 = vector.load %arg3[%c0_5, %c0_6] : memref<7x256xf32, #tpu.memory_space<vmem>>, vector<7x256xf32>
    %5 = tpu.iota {dimensions = array<i32: 0>} : vector<7x256xi32>
    %c2_i32 = arith.constant 2 : i32
    %6 = vector.broadcast %c2_i32 : i32 to vector<7x256xi32>
    %7 = arith.cmpi sge, %5, %6 : vector<7x256xi32>
    %c3_i32 = arith.constant 3 : i32
    %8 = vector.broadcast %c3_i32 : i32 to vector<7x256xi32>
    %9 = arith.cmpi sle, %5, %8 : vector<7x256xi32>
    %10 = arith.andi %7, %9 : vector<7x256xi1>
    %11 = math.absf %1 : vector<7x256xf32>
    %cst = arith.constant 0.000000e+00 : f32
    %12 = vector.broadcast %cst : f32 to vector<7x256xf32>
    %13 = arith.subf %12, %11 : vector<7x256xf32>
    %14 = arith.select %10, %1, %13 : vector<7x256xi1>, vector<7x256xf32>
    %15 = math.exp %14 : vector<7x256xf32>
    %cst_7 = arith.constant 0.000000e+00 : f32
    %16 = vector.broadcast %cst_7 : f32 to vector<7x256xf32>
    %17 = arith.cmpf oge, %1, %16 : vector<7x256xf32>
    %cst_8 = arith.constant 1.000000e+00 : f32
    %18 = vector.broadcast %cst_8 : f32 to vector<7x256xf32>
    %19 = arith.select %17, %18, %15 : vector<7x256xi1>, vector<7x256xf32>
    %cst_9 = arith.constant 1.000000e+00 : f32
    %20 = vector.broadcast %cst_9 : f32 to vector<7x256xf32>
    %21 = arith.addf %20, %15 : vector<7x256xf32>
    %22 = arith.divf %19, %21 : vector<7x256xf32>
    %23 = arith.select %10, %15, %22 : vector<7x256xi1>, vector<7x256xf32>
    %24 = vector.broadcast %3 : vector<7x1xf32> to vector<7x256xf32>
    %25 = arith.mulf %23, %24 : vector<7x256xf32>
    %26 = arith.addf %25, %4 : vector<7x256xf32>
    %c0_10 = arith.constant 0 : index
    %c0_11 = arith.constant 0 : index
    %c0_12 = arith.constant 0 : index
    %27 = vector.load %arg4[%c0_10, %c0_11, %c0_12] : memref<1x7x256xf32, #tpu.memory_space<vmem>>, vector<1x7x256xf32>
    %28 = vector.shape_cast %27 : vector<1x7x256xf32> to vector<7x256xf32>
    %29 = vector.shape_cast %26 : vector<7x256xf32> to vector<1x7x256xf32>
    tpu.vector_store %arg4[%c0_10, %c0_11, %c0_12], %29 {strides = array<i32>} : memref<1x7x256xf32, #tpu.memory_space<vmem>>, vector<1x7x256xf32>,
    return
  }
  func.func @transform_0(%arg0: i32) -> (i32, i32, i32) {
    %c0_i32 = arith.constant 0 : i32
    %c0_i32_0 = arith.constant 0 : i32
    %c0_i32_1 = arith.constant 0 : i32
    return %arg0, %c0_i32, %c0_i32_0 : i32, i32, i32
  }
  func.func @transform_1(%arg0: i32) -> (i32, i32, i32) {
    %c3_i32 = arith.constant 3 : i32
    %c0_i32 = arith.constant 0 : i32
    %0 = arith.cmpi eq, %c3_i32, %c0_i32 : i32
    %c1_i32 = arith.constant 1 : i32
    %1 = arith.select %0, %c1_i32, %c3_i32 : i32
    %2 = arith.remsi %arg0, %1 : i32
    %c0_i32_0 = arith.constant 0 : i32
    %3 = arith.cmpi ne, %2, %c0_i32_0 : i32
    %c0_i32_1 = arith.constant 0 : i32
    %4 = arith.cmpi slt, %2, %c0_i32_1 : i32
    %c0_i32_2 = arith.constant 0 : i32
    %5 = arith.cmpi slt, %1, %c0_i32_2 : i32
    %6 = arith.xori %4, %5 : i1
    %7 = arith.andi %6, %3 : i1
    %8 = arith.addi %2, %1 : i32
    %9 = arith.select %7, %8, %2 : i32
    %c0_i32_3 = arith.constant 0 : i32
    %c0_i32_4 = arith.constant 0 : i32
    %c0_i32_5 = arith.constant 0 : i32
    return %9, %c0_i32_3, %c0_i32_4 : i32, i32, i32
  }
  func.func @transform_2(%arg0: i32) -> (i32, i32) {
    %c0_i32 = arith.constant 0 : i32
    %c0_i32_0 = arith.constant 0 : i32
    %c0_i32_1 = arith.constant 0 : i32
    return %c0_i32, %c0_i32_0 : i32, i32
  }
  func.func @transform_3(%arg0: i32) -> (i32, i32, i32) {
    %c0_i32 = arith.constant 0 : i32
    %c0_i32_0 = arith.constant 0 : i32
    %c0_i32_1 = arith.constant 0 : i32
    return %arg0, %c0_i32, %c0_i32_0 : i32, i32, i32
  }
}

</mosaic_0001>

<llo_original>
// kernel: tpu_custom_call.1
$region0: #{tpu_custom_call.1}
  #allocation0 [shape = 'u32[]', space=smem, size = 0x4, offset = 0x4, fixed_abs, tag = 'smem constant byte address 0x4 - core index']
  #allocation1 [shape = 'u32[144,128]{1,0:T(1,128)}', space=vmem, size = 0x12000, scoped, tag = 'internal scratch']
  %s0 = inlined_call_operand.hbm [shape: f32[6,7,256], index: 0, kind: input, shape index: {}]
  %s1 = inlined_call_operand.vmem [shape: f32[3,7,1], index: 1, kind: input, shape index: {}]
  %s2 = inlined_call_operand.vmem [shape: f32[7,256], index: 2, kind: input, shape index: {}]
  %s3 = inlined_call_operand.hbm [shape: f32[6,7,256], index: 3, kind: output, shape index: {}]
  %s4 = sld [smem:[#allocation0]]
  $region49: #{tpu_custom_call.1} parent=0
    _
  %s6 = ssub.s32 1, %s4
  %s7 = scalar_select 0, %s6, %s4
  $region1: #{tpu_custom_call.1} parent=0
    #allocation2 [shape = 'u8[16384]{0}', space=vmem, size = 0x4000, scoped, tag = 'input window, operand 0']
    #allocation3 [shape = 's32[2]{0}', space=sflag, size = 0x8, scoped, tag = 'scoped memory for tpu_custom_call.1']
    #allocation4 [shape = 's32[2]{0}', space=sflag, size = 0x8, scoped, tag = 'scoped memory for tpu_custom_call.1']
    #allocation5 [shape = 'u8[16384]{0}', space=vmem, size = 0x4000, scoped, tag = 'output window, operand 0']
    %8 = vsyncpa [#allocation3], 0
    %s9 = scalar_lea.sflag [#allocation3], 1
    %10 = vsyncpa %s9, 0
    %11 = vsyncpa [#allocation4], 0
    %s12 = scalar_lea.sflag [#allocation4], 1
    %13 = vsyncpa %s12, 0
    loop: start=0, step=1, limit=8
    $region2: #{tpu_custom_call.1} parent=1 // loop_pre_header
      _
    $region3: #{tpu_custom_call.1} parent=1 // loop_header
      %s15 = sphi 0, %s19
      %p16 = scmp.ge.s32.totalorder %s15, 8
      %s25 = sphi 0, %s27
      %s28 = sphi 0, %s25
      %s29 = sphi 0, %s28
      %s45 = sphi 0, %s29
      %s77 = sphi 0, %s79
      %s80 = sphi 0, %s77
      %s81 = sphi 0, %s80
      %s97 = sphi 0, %s81
      %s101 = sphi 0, %s101
      %s103 = sphi 0, %s101
      %s104 = sphi 0, %s103
      %s118 = sphi 0, %s104
      %s124 = sphi 0, %s126
      %s127 = sphi 0, %s124
      %s128 = sphi 0, %s127
      %s144 = sphi 0, %s128
    $region4: #{tpu_custom_call.1} parent=1 // loop_header_branch
      %18 = sbr.rel (%p16) target = $region8
    $region5: #{tpu_custom_call.1} parent=1 // loop_body
      %s20 = ssub.s32 %s15, 1
      %s21 = ssub.s32 %s15, 2
      %s22 = sadd.s32 %s15, 1
      %s23 = ssub.s32 %s15, %s22
      %p24 = scmp.eq.s32.totalorder %s23, 0
      %s26 = sadd.s32 %s25, 1
      %s27 = scalar_select %p24, %s25, %s26
      %p30 = pneg %p24
      %p31 = scmp.eq.s32.totalorder %s15, 5
      %p32 = por %p30, %p31
      %p33 = scmp.ne.s32.totalorder %s25, %s28
      %p34 = scmp.eq.s32.totalorder %s15, 0
      %p35 = por %p33, %p34
      %p36 = scmp.ne.s32.totalorder %s25, %s28
      %p37 = scmp.eq.s32.totalorder %s20, 5
      %p38 = por %p36, %p37
      %p39 = scmp.ne.s32.totalorder %s28, %s29
      %p40 = scmp.eq.s32.totalorder %s20, 0
      %p41 = por %p39, %p40
      %p42 = scmp.ne.s32.totalorder %s28, %s29
      %p43 = scmp.eq.s32.totalorder %s21, 5
      %p44 = por %p42, %p43
      %p46 = scmp.ne.s32.totalorder %s29, %s45
      %p47 = scmp.eq.s32.totalorder %s21, 0
      %p48 = por %p46, %p47
      %p49 = scmp.lt.s32.totalorder %s15, 0
      %s50 = ssub.s32 0, %s15
      %s51 = scalar_select %p49, %s50, %s15
      %s52 = sdiv.u32.pop %s51, 3
      %s53 = srem.u32.pop %s51, 3
      %s54 = ssub.s32 0, %s53
      %s55 = scalar_select %p49, %s54, %s53
      %p56 = scmp.ne.s32.totalorder %s55, 0
      %p57 = scmp.lt.s32.totalorder %s55, 0
      %p58 = pnand %p57, %p56
      %p59 = pneg %p58
      %s60 = sadd.s32 %s55, 3
      %s61 = scalar_select %p59, %s60, %s55
      %p62 = scmp.lt.s32.totalorder %s22, 0
      %s63 = ssub.s32 0, %s22
      %s64 = scalar_select %p62, %s63, %s22
      %s65 = sdiv.u32.pop %s64, 3
      %s66 = srem.u32.pop %s64, 3
      %s67 = ssub.s32 0, %s66
      %s68 = scalar_select %p62, %s67, %s66
      %p69 = scmp.ne.s32.totalorder %s68, 0
      %p70 = scmp.lt.s32.totalorder %s68, 0
      %p71 = pnand %p70, %p69
      %p72 = pneg %p71
      %s73 = sadd.s32 %s68, 3
      %s74 = scalar_select %p72, %s73, %s68
      %s75 = ssub.s32 %s61, %s74
      %p76 = scmp.eq.s32.totalorder %s75, 0
      %s78 = sadd.s32 %s77, 1
      %s79 = scalar_select %p76, %s77, %s78
      %p82 = pneg %p76
      %p83 = scmp.eq.s32.totalorder %s15, 5
      %p84 = por %p82, %p83
      %p85 = scmp.ne.s32.totalorder %s77, %s80
      %p86 = scmp.eq.s32.totalorder %s15, 0
      %p87 = por %p85, %p86
      %p88 = scmp.ne.s32.totalorder %s77, %s80
      %p89 = scmp.eq.s32.totalorder %s20, 5
      %p90 = por %p88, %p89
      %p91 = scmp.ne.s32.totalorder %s80, %s81
      %p92 = scmp.eq.s32.totalorder %s20, 0
      %p93 = por %p91, %p92
      %p94 = scmp.ne.s32.totalorder %s80, %s81
      %p95 = scmp.eq.s32.totalorder %s21, 5
      %p96 = por %p94, %p95
      %p98 = scmp.ne.s32.totalorder %s81, %s97
      %p99 = scmp.eq.s32.totalorder %s21, 0
      %p100 = por %p98, %p99
      %s102 = sadd.s32 %s101, 1
      %p105 = scmp.eq.s32.totalorder %s15, 5
      %p106 = scmp.ne.s32.totalorder %s101, %s103
      %p107 = scmp.eq.s32.totalorder %s15, 0
      %p108 = por %p106, %p107
      %p109 = scmp.ne.s32.totalorder %s101, %s103
      %p110 = scmp.eq.s32.totalorder %s20, 5
      %p111 = por %p109, %p110
      %p112 = scmp.ne.s32.totalorder %s103, %s104
      %p113 = scmp.eq.s32.totalorder %s20, 0
      %p114 = por %p112, %p113
      %p115 = scmp.ne.s32.totalorder %s103, %s104
      %p116 = scmp.eq.s32.totalorder %s21, 5
      %p117 = por %p115, %p116
      %p119 = scmp.ne.s32.totalorder %s104, %s118
      %p120 = scmp.eq.s32.totalorder %s21, 0
      %p121 = por %p119, %p120
      %s122 = ssub.s32 %s15, %s22
      %p123 = scmp.eq.s32.totalorder %s122, 0
      %s125 = sadd.s32 %s124, 1
      %s126 = scalar_select %p123, %s124, %s125
      %p129 = pneg %p123
      %p130 = scmp.eq.s32.totalorder %s15, 5
      %p131 = por %p129, %p130
      %p132 = scmp.ne.s32.totalorder %s124, %s127
      %p133 = scmp.eq.s32.totalorder %s15, 0
      %p134 = por %p132, %p133
      %p135 = scmp.ne.s32.totalorder %s124, %s127
      %p136 = scmp.eq.s32.totalorder %s20, 5
      %p137 = por %p135, %p136
      %p138 = scmp.ne.s32.totalorder %s127, %s128
      %p139 = scmp.eq.s32.totalorder %s20, 0
      %p140 = por %p138, %p139
      %p141 = scmp.ne.s32.totalorder %s127, %s128
      %p142 = scmp.eq.s32.totalorder %s21, 5
      %p143 = por %p141, %p142
      %p145 = scmp.ne.s32.totalorder %s128, %s144
      %p146 = scmp.eq.s32.totalorder %s21, 0
      %p147 = por %p145, %p146
      %p148 = scmp.le.s32.totalorder 1, %s15
      %p149 = scmp.lt.s32.totalorder %s15, 7
      %p150 = pnand %p148, %p149
      %p151 = pneg %p150
      // Predicated region
      $region9: #{tpu_custom_call.1} parent=5 // pred_check
        _
      $region10: #{tpu_custom_call.1} parent=5 // pred_check_branch
        %153 = sbr.rel (%p150) target = $region12
      $region11: #{tpu_custom_call.1} parent=5 // pred_region
        %s154 = ssub.s32 %s15, 1
        // Predicated region
        $region13: #{tpu_custom_call.1} parent=11 // pred_check
          %p155 = pneg %p114
        $region14: #{tpu_custom_call.1} parent=11 // pred_check_branch
          %157 = sbr.rel (%p155) target = $region16
        $region15: #{tpu_custom_call.1} parent=11 // pred_region
          _
        $region16: #{tpu_custom_call.1} parent=11 // pred_fallthru
          _
      $region12: #{tpu_custom_call.1} parent=5 // pred_fallthru
        _
      %p158 = scmp.lt.s32.totalorder %s15, 6
      // Predicated region
      $region17: #{tpu_custom_call.1} parent=5 // pred_check
        %p159 = pneg %p158
      $region18: #{tpu_custom_call.1} parent=5 // pred_check_branch
        %161 = sbr.rel (%p159) target = $region20
      $region19: #{tpu_custom_call.1} parent=5 // pred_region
        // Predicated region
        $region21: #{tpu_custom_call.1} parent=19 // pred_check
          %p162 = pneg %p35
        $region22: #{tpu_custom_call.1} parent=19 // pred_check_branch
          %164 = sbr.rel (%p162) target = $region24
        $region23: #{tpu_custom_call.1} parent=19 // pred_region
          %s165 = sand.u32 %s25, 1
          %s166 = scalar_lea.sflag [#allocation3], %s165
          %s167 = sand.u32 %s25, 1
          %s168 = smul.addr %s167, 16
          %s169 = scalar_lea.vmem [#allocation2], %s168
          %s171 = ssub.s32 256, 256
          %172 = vsyncadd %s166, %s171
          %s173 = smul.addr %s15, 2
          %s174 = smul.addr %s173, 128
          %s175 = scalar_lea.hbm %s0, %s174
          %s177 = sshll.u32 %s169, 4
          %s178 = int_to_ptr.vmem [resolvable:$true] %s177
          %180 = dma.hbm_to_vmem [thread:$0]  %s175, 256, %s178, %s166
        $region24: #{tpu_custom_call.1} parent=19 // pred_fallthru
          _
        // Predicated region
        $region25: #{tpu_custom_call.1} parent=19 // pred_check
          %p181 = pneg %p87
        $region26: #{tpu_custom_call.1} parent=19 // pred_check_branch
          %183 = sbr.rel (%p181) target = $region28
        $region27: #{tpu_custom_call.1} parent=19 // pred_region
          %p184 = scmp.lt.s32.totalorder %s15, 0
          %s185 = ssub.s32 0, %s15
          %s186 = scalar_select %p184, %s185, %s15
          %s187 = sdiv.u32.pop %s186, 3
          %s188 = srem.u32.pop %s186, 3
          %s189 = ssub.s32 0, %s188
          %s190 = scalar_select %p184, %s189, %s188
          %p191 = scmp.ne.s32.totalorder %s190, 0
          %p192 = scmp.lt.s32.totalorder %s190, 0
          %p193 = pnand %p192, %p191
          %p194 = pneg %p193
          %s195 = sadd.s32 %s190, 3
          %s196 = scalar_select %p194, %s195, %s190
          %p197 = scmp.lt.s32.totalorder %s196, 2
          %s198 = scalar_select %p197, %s196, 2
          %s199 = smul.addr %s198, 8
          %s200 = scalar_lea.vmem %s1, %s199
          %p201 = scmp.lt.s32.totalorder %s15, 0
          %s202 = ssub.s32 0, %s15
          %s203 = scalar_select %p201, %s202, %s15
          %s204 = sdiv.u32.pop %s203, 3
          %s205 = srem.u32.pop %s203, 3
          %s206 = ssub.s32 0, %s205
          %s207 = scalar_select %p201, %s206, %s205
          %p208 = scmp.ne.s32.totalorder %s207, 0
          %p209 = scmp.lt.s32.totalorder %s207, 0
          %p210 = pnand %p209, %p208
          %p211 = pneg %p210
          %s212 = sadd.s32 %s207, 3
          %s213 = scalar_select %p211, %s212, %s207
        $region28: #{tpu_custom_call.1} parent=19 // pred_fallthru
          _
      $region20: #{tpu_custom_call.1} parent=5 // pred_fallthru
        _
      %p214 = scmp.le.s32.totalorder 1, %s15
      %p215 = scmp.lt.s32.totalorder %s15, 7
      %p216 = pnand %p214, %p215
      %p217 = pneg %p216
      // Predicated region
      $region29: #{tpu_custom_call.1} parent=5 // pred_check
        _
      $region30: #{tpu_custom_call.1} parent=5 // pred_check_branch
        %219 = sbr.rel (%p216) target = $region32
      $region31: #{tpu_custom_call.1} parent=5 // pred_region
        %s220 = ssub.s32 %s15, 1
        %s221 = sand.u32 %s28, 1
        %s222 = scalar_lea.sflag [#allocation3], %s221
        %s223 = sand.u32 %s28, 1
        %s224 = smul.addr %s223, 16
        %s225 = scalar_lea.vmem [#allocation2], %s224
        // Predicated region
        $region33: #{tpu_custom_call.1} parent=31 // pred_check
          %p226 = pneg %p41
        $region34: #{tpu_custom_call.1} parent=31 // pred_check_branch
          %228 = sbr.rel (%p226) target = $region36
        $region35: #{tpu_custom_call.1} parent=31 // pred_region
          %229 = dma.done %s222, 256
        $region36: #{tpu_custom_call.1} parent=31 // pred_fallthru
          _
        %s230 = sand.u32 %s28, 1
        %s231 = scalar_lea.sflag [#allocation3], %s230
        %s232 = sand.u32 %s28, 1
        %s233 = smul.addr %s232, 16
        %s234 = scalar_lea.vmem [#allocation2], %s233
        %p235 = pneg %p41
        %p236 = pneg %p38
        %p237 = scmp.lt.s32.totalorder %s20, 0
        %s238 = ssub.s32 0, %s20
        %s239 = scalar_select %p237, %s238, %s20
        %s240 = sdiv.u32.pop %s239, 3
        %s241 = srem.u32.pop %s239, 3
        %s242 = ssub.s32 0, %s241
        %s243 = scalar_select %p237, %s242, %s241
        %p244 = scmp.ne.s32.totalorder %s243, 0
        %p245 = scmp.lt.s32.totalorder %s243, 0
        %p246 = pnand %p245, %p244
        %p247 = pneg %p246
        %s248 = sadd.s32 %s243, 3
        %s249 = scalar_select %p247, %s248, %s243
        %p250 = scmp.lt.s32.totalorder %s249, 2
        %s251 = scalar_select %p250, %s249, 2
        %s252 = smul.addr %s251, 8
        %s253 = scalar_lea.vmem %s1, %s252
        %p254 = pneg %p93
        %p255 = pneg %p90
        %p256 = pneg %p114
        %p257 = pneg %p111
        %p258 = pneg %p140
        %p259 = pneg %p137
        %s260 = sand.u32 %s127, 1
        %s261 = scalar_lea.sflag [#allocation4], %s260
        %s262 = sand.u32 %s127, 1
        %s263 = smul.addr %s262, 16
        %s264 = scalar_lea.vmem [#allocation5], %s263
        %p265 = scmp.lt.s32.totalorder %s20, 0
        %s266 = ssub.s32 0, %s20
        %s267 = scalar_select %p265, %s266, %s20
        %s268 = sdiv.u32.pop %s267, 3
        %s269 = srem.u32.pop %s267, 3
        %s270 = ssub.s32 0, %s269
        %s271 = scalar_select %p265, %s270, %s269
        %p272 = scmp.ne.s32.totalorder %s271, 0
        %p273 = scmp.lt.s32.totalorder %s271, 0
        %p274 = pnand %p273, %p272
        %p275 = pneg %p274
        %s276 = sadd.s32 %s271, 3
        %s277 = scalar_select %p275, %s276, %s271
        %p278 = scmp.lt.s32.totalorder %s277, 2
        %s279 = scalar_select %p278, %s277, 2
        %s280 = smul.addr %s279, 8
        %s281 = scalar_lea.vmem %s1, %s280
        %p282 = scmp.lt.s32.totalorder %s20, 0
        %s283 = ssub.s32 0, %s20
        %s284 = scalar_select %p282, %s283, %s20
        %s285 = sdiv.u32.pop %s284, 3
        %s286 = srem.u32.pop %s284, 3
        %s287 = ssub.s32 0, %s286
        %s288 = scalar_select %p282, %s287, %s286
        %p289 = scmp.ne.s32.totalorder %s288, 0
        %p290 = scmp.lt.s32.totalorder %s288, 0
        %p291 = pnand %p290, %p289
        %p292 = pneg %p291
        %s293 = sadd.s32 %s288, 3
        %s294 = scalar_select %p292, %s293, %s288
        %v295 = vld [vmem:[%s225] sm:$0x7f]
        %v296 = vld [vmem:[%s225 + $0x8] sm:$0x7f]
        %v297 = vld [vmem:[%s281] sm:$0x7f]
        %v298 = vld [vmem:[%s2] sm:$0x7f]
        %v299 = vld [vmem:[%s2 + $0x8] sm:$0x7f]
        %v300 = vlaneseq
        %v301 = vshrl.u32 %v300, 7
        %vm302 = vcmp.ge.s32.totalorder %v301, 2
        %vm303 = vcmp.le.s32.totalorder %v301, 3
        %vm304 = vmand %vm302, %vm303
        %v305 = vand.u32 2147483647, %v295
        %v306 = vand.u32 2147483647, %v296
        %v307 = vsub.f32 0.0, %v305
        %v308 = vsub.f32 0.0, %v306
        %v309 = vsel %vm304, %v295, %v307
        %v310 = vsel %vm304, %v296, %v308
        %v311 = vmul.f32 %v309, 1.442695
        %v312 = vpow.pop %v311
        %v313 = vmul.f32 %v310, 1.442695
        %v314 = vpow.pop %v313
        %vm315 = vcmp.ge.f32.partialorder %v295, 0.0
        %vm316 = vcmp.ge.f32.partialorder %v296, 0.0
        %v317 = vsel %vm315, 1.0, %v312
        %v318 = vsel %vm316, 1.0, %v314
        %v319 = vadd.f32 %v312, 1.0
        %v320 = vadd.f32 %v314, 1.0
        %v321 = vrcp.pop %v319
        %v322 = vmul.f32 %v317, %v321
        %v323 = vrcp.pop %v320
        %v324 = vmul.f32 %v318, %v323
        %v325 = vsel %vm304, %v312, %v322
        %v326 = vsel %vm304, %v314, %v324
        %328 = vset.pattern.permute.xlu0 0
        %329 = vperm.xlu0 %328, %v297
        %v330 = vpop.permute.xlu0 %329
        %v332 = vmul.f32 %v325, %v330
        %v333 = vmul.f32 %v326, %v330
        %v334 = vadd.f32 %v332, %v298
        %v335 = vadd.f32 %v333, %v299
        %336 = vst [vmem:[%s264] sm:$0x7f] %v334
        %337 = vst [vmem:[%s264 + $0x8] sm:$0x7f] %v335
        %s338 = sand.u32 %s127, 1
        %s339 = scalar_lea.sflag [#allocation4], %s338
        %s340 = sand.u32 %s127, 1
        %s341 = smul.addr %s340, 16
        %s342 = scalar_lea.vmem [#allocation5], %s341
        // Predicated region
        $region37: #{tpu_custom_call.1} parent=31 // pred_check
          %p343 = pneg %p137
        $region38: #{tpu_custom_call.1} parent=31 // pred_check_branch
          %345 = sbr.rel (%p343) target = $region40
        $region39: #{tpu_custom_call.1} parent=31 // pred_region
          %s347 = ssub.s32 256, 256
          %348 = vsyncadd %s339, %s347
          %s349 = smul.addr %s20, 2
          %s350 = smul.addr %s349, 128
          %s351 = scalar_lea.hbm %s3, %s350
          %s353 = sshll.u32 %s342, 4
          %s354 = int_to_ptr.vmem [resolvable:$true] %s353
          %356 = dma.vmem_to_hbm [thread:$0]  %s354, 256, %s351, %s339
        $region40: #{tpu_custom_call.1} parent=31 // pred_fallthru
          _
      $region32: #{tpu_custom_call.1} parent=5 // pred_fallthru
        _
      %p357 = scmp.le.s32.totalorder 2, %s15
      // Predicated region
      $region41: #{tpu_custom_call.1} parent=5 // pred_check
        %p358 = pneg %p357
      $region42: #{tpu_custom_call.1} parent=5 // pred_check_branch
        %360 = sbr.rel (%p358) target = $region44
      $region43: #{tpu_custom_call.1} parent=5 // pred_region
        %s361 = ssub.s32 %s15, 2
        // Predicated region
        $region45: #{tpu_custom_call.1} parent=43 // pred_check
          %p362 = pneg %p143
        $region46: #{tpu_custom_call.1} parent=43 // pred_check_branch
          %364 = sbr.rel (%p362) target = $region48
        $region47: #{tpu_custom_call.1} parent=43 // pred_region
          %s365 = sand.u32 %s128, 1
          %s366 = scalar_lea.sflag [#allocation4], %s365
          %s367 = sand.u32 %s128, 1
          %s368 = smul.addr %s367, 16
          %s369 = scalar_lea.vmem [#allocation5], %s368
          %370 = dma.done %s366, 256
        $region48: #{tpu_custom_call.1} parent=43 // pred_fallthru
          _
      $region44: #{tpu_custom_call.1} parent=5 // pred_fallthru
        _
    $region6: #{tpu_custom_call.1} parent=1 // loop_footer
      %s19 = sadd.s32 1, %s15
    $region7: #{tpu_custom_call.1} parent=1 // loop_footer_branch
      %14 = sbr.rel target = $region3
    $region8: #{tpu_custom_call.1} parent=1 // loop_exit
      _
    %371 = vsyncpa [#allocation3], 1
    %s372 = scalar_lea.sflag [#allocation3], 1
    %373 = vsyncpa %s372, 1
    %374 = vsyncpa [#allocation4], 1
    %s375 = scalar_lea.sflag [#allocation4], 1
    %376 = vsyncpa %s375, 1

</llo_original>
